<compile_context>
chip_gen: v7x
topology: tpu7x:2x2x1
jax: 0.10.0
libtpu: 0.0.40
codegen_flags: <defaults>
</compile_context>

<pallas_src>
import functools

import jax
import jax.numpy as jnp
from jax.experimental import pallas as pl
from jax.experimental.pallas import tpu as pltpu


def _regl1_kernel(pred_ref, ind_ref, mask_ref, targ_ref, out_ref, gacc_ref,
                  *, c, k, tile_hw, precision):
    h = pl.program_id(1)
    nh = pl.num_programs(1)

    # ---- one-hot gather of the K requested spatial positions, this HW tile --
    # Fold the tile offset into the (K,1) index vector (cheap) instead of the
    # (K,T) iota (expensive); one-hot is (K, T) with T on the lane axis.
    ind_local = ind_ref[0] - h * tile_hw                          # (K, 1) int32
    pos = jax.lax.broadcasted_iota(jnp.int32, (k, tile_hw), 1)    # (K, T)
    onehot = (pos == ind_local).astype(pred_ref.dtype)            # (K, T) native
    pred_t = pred_ref[0]                                          # (C, T) native
    # gathered[c, k] = sum_t pred[c, t] * onehot[k, t]   (A @ B^T on the MXU)
    g = jax.lax.dot_general(pred_t, onehot,
                            dimension_numbers=(((1,), (1,)), ((), ())),
                            preferred_element_type=jnp.float32,
                            precision=precision)                  # (C, K) f32

    @pl.when(h == 0)
    def _():
        gacc_ref[...] = g          # first tile: write, no zero-fill + add

    @pl.when(h != 0)
    def _():
        gacc_ref[...] += g

    # ---- finalize: masked smooth-L1 partial sums for this batch element -----
    @pl.when(h == nh - 1)
    def _():
        m = mask_ref[0].astype(jnp.float32)                       # (1, K)
        t = targ_ref[0].astype(jnp.float32)                       # (C, K)
        gk = gacc_ref[...]                                        # (C, K)
        diff = gk * m - t * m
        ad = jnp.abs(diff)
        # smooth L1, beta = 1.0 (PyTorch default)
        elem = jnp.where(ad < 1.0, 0.5 * ad * ad, ad - 0.5)
        loss_sum = jnp.sum(elem)
        cnt_sum = jnp.sum(m) * float(c)                           # expanded mask
        lane = jax.lax.broadcasted_iota(jnp.int32, (1, 1, 128), 2)
        out_ref[...] = jnp.where(lane == 0, loss_sum,
                                 jnp.where(lane == 1, cnt_sum, 0.0))


def _ceil_to(n, m):
    return -(-n // m) * m


def _vmem_bytes(tile_hw, c, k, itemsize):
    # Padding-aware footprint: pred block sublane-pads C to the dtype's packing
    # (8 rows for f32, 16 for bf16); one-hot temp sublane-pads K to 8.
    pack = 8 * max(1, 4 // itemsize)
    c_pad = _ceil_to(c, pack)
    k_pad = _ceil_to(k, 8)
    return (2 * c_pad * tile_hw * itemsize          # double-buffered pred block
            + k_pad * tile_hw * (itemsize + 4)      # one-hot temp + int32 iota
            + 512 * 1024)                           # small blocks/scratch/out


def _pick_tile_hw(hw, c, k, itemsize, budget=24 * 1024 * 1024):
    # Prefer the full HW extent (one grid step per batch), then the largest
    # 128-multiple divisor whose padding-aware footprint stays in budget.
    cands = [hw] + [t for t in (8192, 4096, 2048, 1024, 512, 256, 128)
                    if t < hw and hw % t == 0]
    for t in cands:
        if _vmem_bytes(t, c, k, itemsize) <= budget:
            return t
    # Fallback (may exceed budget only for extreme K; acceptable for RegL1).
    return 128 if hw % 128 == 0 else hw


def reg_l1_loss(pred, mask, ind, target):
    """pred: [B, C, H, W]; mask: [B, K]; ind: [B, K] int; target: [B, K, C]."""
    b, c, hgt, wid = pred.shape
    k = ind.shape[1]
    hw = hgt * wid
    itemsize = pred.dtype.itemsize

    # Layout glue only -- no extra HBM pass over the big pred tensor.
    pred3 = pred.reshape(b, c, hw)                        # free view of NCHW
    ind3 = ind.astype(jnp.int32).reshape(b, k, 1)         # tiny; K on sublanes
    mask3 = mask.astype(jnp.float32).reshape(b, 1, k)     # tiny
    targ3 = jnp.swapaxes(target, 1, 2)                    # [B, C, K], tiny

    tile_hw = _pick_tile_hw(hw, c, k, itemsize)
    nh = hw // tile_hw
    assert nh * tile_hw == hw

    # Scoped-VMEM limit: enough for the chosen tile, capped per generation
    # (v7x: 64 MiB physical VMEM/TC -> cap 48 MiB; v5e/v6e: 128 MiB -> 64 MiB).
    try:
        phys_vmem = pltpu.get_tpu_info().vmem_capacity_bytes
    except Exception:
        phys_vmem = 128 * 1024 * 1024
    cap = min(64 * 1024 * 1024, (phys_vmem * 3) // 4)
    need = _vmem_bytes(tile_hw, c, k, itemsize)
    vmem_limit = int(min(cap, max(32 * 1024 * 1024, 2 * need)))

    # f32 pred: HIGHEST keeps the one-hot gather exact on the MXU; bf16 pred is
    # exact at DEFAULT (0/1 one-hot in native dtype, single-pass matmul).
    precision = (jax.lax.Precision.HIGHEST if pred.dtype == jnp.float32
                 else jax.lax.Precision.DEFAULT)

    kernel = functools.partial(_regl1_kernel, c=c, k=k, tile_hw=tile_hw,
                               precision=precision)

    parts = pl.pallas_call(
        kernel,
        out_shape=jax.ShapeDtypeStruct((b, 1, 128), jnp.float32),
        grid_spec=pltpu.PrefetchScalarGridSpec(
            num_scalar_prefetch=0,
            grid=(b, nh),
            in_specs=[
                pl.BlockSpec((1, c, tile_hw), lambda i, j: (i, 0, j)),
                pl.BlockSpec((1, k, 1), lambda i, j: (i, 0, 0)),
                pl.BlockSpec((1, 1, k), lambda i, j: (i, 0, 0)),
                pl.BlockSpec((1, c, k), lambda i, j: (i, 0, 0)),
            ],
            out_specs=pl.BlockSpec((1, 1, 128), lambda i, j: (i, 0, 0)),
            scratch_shapes=[pltpu.VMEM((c, k), jnp.float32)],
        ),
        compiler_params=pltpu.CompilerParams(
            dimension_semantics=("parallel", "arbitrary"),
            vmem_limit_bytes=vmem_limit,
        ),
    )(pred3, ind3, mask3, targ3)

    # Tiny cross-batch combine + normalization (loss / (expanded_mask.sum()+1e-4)).
    # Note: with B == 1 on v7x only one TensorCore gets work; splitting the HW
    # reduction into per-core partial gathers would fix that (not needed here).
    return jnp.sum(parts[:, 0, 0]) / (jnp.sum(parts[:, 0, 1]) + 1e-4)


def _reference(pred, mask, ind, target):
    b, c, h, w = pred.shape
    feat = jnp.transpose(pred, (0, 2, 3, 1)).reshape(b, h * w, c)
    gathered = jnp.take_along_axis(feat, ind[:, :, None].astype(jnp.int32),
                                   axis=1)                      # [B, K, C]
    m = mask.astype(jnp.float32)[:, :, None]                    # [B, K, 1]
    x = gathered * m - target * m
    ax = jnp.abs(x)
    l = jnp.where(ax < 1.0, 0.5 * ax * ax, ax - 0.5)
    return jnp.sum(l) / (jnp.sum(m) * c + 1e-4)


if __name__ == "__main__":
    key = jax.random.PRNGKey(0)
    k1, k2, k3, k4 = jax.random.split(key, 4)

    B, C, H, W, K = 2, 4, 16, 16, 8
    pred = jax.random.normal(k1, (B, C, H, W), dtype=jnp.float32)
    ind = jax.random.randint(k2, (B, K), 0, H * W, dtype=jnp.int32)
    mask = (jax.random.uniform(k3, (B, K)) > 0.3).astype(jnp.float32)
    target = jax.random.normal(k4, (B, K, C), dtype=jnp.float32)

    out = reg_l1_loss(pred, mask, ind, target)
    out = jax.block_until_ready(out)

    ref = _reference(pred, mask, ind, target)
    assert jnp.allclose(out, ref, atol=1e-5, rtol=1e-5), (out, ref)

    print("KERNEL_OK")
</pallas_src>

<mosaic_0001>
module attributes {stable_mosaic.version = 11 : i64} {
  func.func @_regl1_kernel(%arg0: i32, %arg1: i32, %arg2: memref<1x4x256xf32, #tpu.memory_space<vmem>>, %arg3: memref<1x8x1xi32, #tpu.memory_space<vmem>>, %arg4: memref<1x1x8xf32, #tpu.memory_space<vmem>>, %arg5: memref<1x4x8xf32, #tpu.memory_space<vmem>>, %arg6: memref<1x1x128xf32, #tpu.memory_space<vmem>>, %arg7: memref<4x8xf32, #tpu.memory_space<vmem>>) attributes {dimension_semantics = [#tpu.dimension_semantics<parallel>, #tpu.dimension_semantics<arbitrary>], iteration_bounds = array<i64: 2, 1>, scalar_prefetch = 0 : i64, scratch_operands = 1 : i64, tpu.core_type = #tpu.core_type<tc>, window_params = [{transform_indices = @transform_0, window_bounds = array<i64: 1, 4, 256>}, {transform_indices = @transform_1, window_bounds = array<i64: 1, 8, 1>}, {transform_indices = @transform_2, window_bounds = array<i64: 1, 1, 8>}, {transform_indices = @transform_3, window_bounds = array<i64: 1, 4, 8>}, {transform_indices = @transform_4, window_bounds = array<i64: 1, 1, 128>}]} {
    %c0 = arith.constant 0 : index
    %c0_0 = arith.constant 0 : index
    %c0_1 = arith.constant 0 : index
    %0 = vector.load %arg3[%c0, %c0_0, %c0_1] : memref<1x8x1xi32, #tpu.memory_space<vmem>>, vector<1x8x1xi32>
    %1 = vector.shape_cast %0 : vector<1x8x1xi32> to vector<8x1xi32>
    %c256_i32 = arith.constant 256 : i32
    %2 = arith.muli %arg1, %c256_i32 : i32
    %3 = vector.broadcast %2 : i32 to vector<8x1xi32>
    %4 = arith.subi %1, %3 : vector<8x1xi32>
    %5 = tpu.iota {dimensions = array<i32: 1>} : vector<8x256xi32>
    %6 = vector.broadcast %4 : vector<8x1xi32> to vector<8x256xi32>
    %7 = arith.cmpi eq, %5, %6 : vector<8x256xi32>
    %8 = arith.extui %7 : vector<8x256xi1> to vector<8x256xi32>
    %9 = arith.sitofp %8 : vector<8x256xi32> to vector<8x256xf32>
    %c0_2 = arith.constant 0 : index
    %c0_3 = arith.constant 0 : index
    %c0_4 = arith.constant 0 : index
    %10 = vector.load %arg2[%c0_2, %c0_3, %c0_4] : memref<1x4x256xf32, #tpu.memory_space<vmem>>, vector<1x4x256xf32>
    %11 = vector.shape_cast %10 : vector<1x4x256xf32> to vector<4x256xf32>
    %cst = arith.constant dense<0.000000e+00> : vector<4x8xf32>
    %12 = tpu.matmul %11, %9, %cst {dimension_numbers = #tpu.dot_dimension_numbers<[1], [1], [0], [0], [0, 0, 1, 0], [], []>, precision = #tpu.contract_precision<fp32>} : vector<4x256xf32>, vector<8x256xf32>, vector<4x8xf32> -> vector<4x8xf32>
    %c0_i32 = arith.constant 0 : i32
    %13 = arith.cmpi eq, %arg1, %c0_i32 : i32
    %14 = arith.extui %13 : i1 to i32
    %c0_i32_5 = arith.constant 0 : i32
    %15 = arith.cmpi ne, %14, %c0_i32_5 : i32
    scf.if %15 {
      %c0_10 = arith.constant 0 : index
      %c0_11 = arith.constant 0 : index
      %22 = vector.load %arg7[%c0_10, %c0_11] : memref<4x8xf32, #tpu.memory_space<vmem>>, vector<4x8xf32>
      tpu.vector_store %arg7[%c0_10, %c0_11], %12 {strides = array<i32>} : memref<4x8xf32, #tpu.memory_space<vmem>>, vector<4x8xf32>,
    } else {
    }
    %c0_i32_6 = arith.constant 0 : i32
    %16 = arith.cmpi ne, %arg1, %c0_i32_6 : i32
    %17 = arith.extui %16 : i1 to i32
    %c0_i32_7 = arith.constant 0 : i32
    %18 = arith.cmpi ne, %17, %c0_i32_7 : i32
    scf.if %18 {
      %c0_10 = arith.constant 0 : index
      %c0_11 = arith.constant 0 : index
      %22 = vector.load %arg7[%c0_10, %c0_11] : memref<4x8xf32, #tpu.memory_space<vmem>>, vector<4x8xf32>
      %23 = arith.addf %22, %12 : vector<4x8xf32>
      %c0_12 = arith.constant 0 : index
      %c0_13 = arith.constant 0 : index
      %24 = vector.load %arg7[%c0_12, %c0_13] : memref<4x8xf32, #tpu.memory_space<vmem>>, vector<4x8xf32>
      tpu.vector_store %arg7[%c0_12, %c0_13], %23 {strides = array<i32>} : memref<4x8xf32, #tpu.memory_space<vmem>>, vector<4x8xf32>,
    } else {
    }
    %c0_i32_8 = arith.constant 0 : i32
    %19 = arith.cmpi eq, %arg1, %c0_i32_8 : i32
    %20 = arith.extui %19 : i1 to i32
    %c0_i32_9 = arith.constant 0 : i32
    %21 = arith.cmpi ne, %20, %c0_i32_9 : i32
    scf.if %21 {
      %c0_10 = arith.constant 0 : index
      %c0_11 = arith.constant 0 : index
      %c0_12 = arith.constant 0 : index
      %22 = vector.load %arg4[%c0_10, %c0_11, %c0_12] : memref<1x1x8xf32, #tpu.memory_space<vmem>>, vector<1x1x8xf32>
      %23 = vector.shape_cast %22 : vector<1x1x8xf32> to vector<1x8xf32>
      %c0_13 = arith.constant 0 : index
      %c0_14 = arith.constant 0 : index
      %c0_15 = arith.constant 0 : index
      %24 = vector.load %arg5[%c0_13, %c0_14, %c0_15] : memref<1x4x8xf32, #tpu.memory_space<vmem>>, vector<1x4x8xf32>
      %25 = vector.shape_cast %24 : vector<1x4x8xf32> to vector<4x8xf32>
      %c0_16 = arith.constant 0 : index
      %c0_17 = arith.constant 0 : index
      %26 = vector.load %arg7[%c0_16, %c0_17] : memref<4x8xf32, #tpu.memory_space<vmem>>, vector<4x8xf32>
      %27 = vector.broadcast %23 : vector<1x8xf32> to vector<4x8xf32>
      %28 = arith.mulf %26, %27 : vector<4x8xf32>
      %29 = vector.broadcast %23 : vector<1x8xf32> to vector<4x8xf32>
      %30 = arith.mulf %25, %29 : vector<4x8xf32>
      %31 = arith.subf %28, %30 : vector<4x8xf32>
      %32 = math.absf %31 : vector<4x8xf32>
      %cst_18 = arith.constant 1.000000e+00 : f32
      %33 = vector.broadcast %cst_18 : f32 to vector<4x8xf32>
      %34 = arith.cmpf olt, %32, %33 : vector<4x8xf32>
      %cst_19 = arith.constant 5.000000e-01 : f32
      %35 = vector.broadcast %cst_19 : f32 to vector<4x8xf32>
      %36 = arith.mulf %35, %32 : vector<4x8xf32>
      %37 = arith.mulf %36, %32 : vector<4x8xf32>
      %cst_20 = arith.constant 5.000000e-01 : f32
      %38 = vector.broadcast %cst_20 : f32 to vector<4x8xf32>
      %39 = arith.subf %32, %38 : vector<4x8xf32>
      %40 = arith.select %34, %37, %39 : vector<4x8xi1>, vector<4x8xf32>
      %41 = vector.shape_cast %40 : vector<4x8xf32> to vector<1x4x8xf32>
      %cst_21 = arith.constant dense<0.000000e+00> : vector<1xf32>
      %42 = vector.multi_reduction <add>, %41, %cst_21 [1, 2] : vector<1x4x8xf32> to vector<1xf32>
      %43 = vector.shape_cast %42 : vector<1xf32> to vector<1x1x1xf32>
      %44 = vector.extract %43[0, 0, 0] : f32 from vector<1x1x1xf32>
      %45 = vector.shape_cast %23 : vector<1x8xf32> to vector<1x1x8xf32>
      %cst_22 = arith.constant dense<0.000000e+00> : vector<1xf32>
      %46 = vector.multi_reduction <add>, %45, %cst_22 [1, 2] : vector<1x1x8xf32> to vector<1xf32>
      %47 = vector.shape_cast %46 : vector<1xf32> to vector<1x1x1xf32>
      %48 = vector.extract %47[0, 0, 0] : f32 from vector<1x1x1xf32>
      %cst_23 = arith.constant 4.000000e+00 : f32
      %49 = arith.mulf %48, %cst_23 : f32
      %50 = tpu.iota {dimensions = array<i32: 2>} : vector<1x1x128xi32>
      %c0_i32_24 = arith.constant 0 : i32
      %51 = vector.broadcast %c0_i32_24 : i32 to vector<1x1x128xi32>
      %52 = arith.cmpi eq, %50, %51 : vector<1x1x128xi32>
      %c1_i32 = arith.constant 1 : i32
      %53 = vector.broadcast %c1_i32 : i32 to vector<1x1x128xi32>
      %54 = arith.cmpi eq, %50, %53 : vector<1x1x128xi32>
      %cst_25 = arith.constant 0.000000e+00 : f32
      %55 = vector.broadcast %49 : f32 to vector<1x1x128xf32>
      %56 = vector.broadcast %cst_25 : f32 to vector<1x1x128xf32>
      %57 = arith.select %54, %55, %56 : vector<1x1x128xi1>, vector<1x1x128xf32>
      %58 = vector.broadcast %44 : f32 to vector<1x1x128xf32>
      %59 = arith.select %52, %58, %57 : vector<1x1x128xi1>, vector<1x1x128xf32>
      %c0_26 = arith.constant 0 : index
      %c0_27 = arith.constant 0 : index
      %c0_28 = arith.constant 0 : index
      %60 = vector.load %arg6[%c0_26, %c0_27, %c0_28] : memref<1x1x128xf32, #tpu.memory_space<vmem>>, vector<1x1x128xf32>
      tpu.vector_store %arg6[%c0_26, %c0_27, %c0_28], %59 {strides = array<i32>} : memref<1x1x128xf32, #tpu.memory_space<vmem>>, vector<1x1x128xf32>,
    } else {
    }
    return
  }
  func.func @transform_0(%arg0: i32, %arg1: i32) -> (i32, i32, i32) {
    %c0_i32 = arith.constant 0 : i32
    %c0_i32_0 = arith.constant 0 : i32
    return %arg0, %c0_i32, %arg1 : i32, i32, i32
  }
  func.func @transform_1(%arg0: i32, %arg1: i32) -> (i32, i32, i32) {
    %c0_i32 = arith.constant 0 : i32
    %c0_i32_0 = arith.constant 0 : i32
    %c0_i32_1 = arith.constant 0 : i32
    return %arg0, %c0_i32, %c0_i32_0 : i32, i32, i32
  }
  func.func @transform_2(%arg0: i32, %arg1: i32) -> (i32, i32, i32) {
    %c0_i32 = arith.constant 0 : i32
    %c0_i32_0 = arith.constant 0 : i32
    %c0_i32_1 = arith.constant 0 : i32
    return %arg0, %c0_i32, %c0_i32_0 : i32, i32, i32
  }
  func.func @transform_3(%arg0: i32, %arg1: i32) -> (i32, i32, i32) {
    %c0_i32 = arith.constant 0 : i32
    %c0_i32_0 = arith.constant 0 : i32
    %c0_i32_1 = arith.constant 0 : i32
    return %arg0, %c0_i32, %c0_i32_0 : i32, i32, i32
  }
  func.func @transform_4(%arg0: i32, %arg1: i32) -> (i32, i32, i32) {
    %c0_i32 = arith.constant 0 : i32
    %c0_i32_0 = arith.constant 0 : i32
    %c0_i32_1 = arith.constant 0 : i32
    return %arg0, %c0_i32, %c0_i32_0 : i32, i32, i32
  }
}

</mosaic_0001>

<llo_original>
// kernel: tpu_custom_call.1
$region0: #{tpu_custom_call.1}
  #allocation0 [shape = 'u32[]', space=smem, size = 0x4, offset = 0x4, fixed_abs, tag = 'smem constant byte address 0x4 - core index']
  #allocation1 [shape = 'u32[144,128]{1,0:T(1,128)}', space=vmem, size = 0x12000, scoped, tag = 'internal scratch']
  #allocation2 [shape = 'f32[4,8]{1,0:T(4,128)}', space=vmem, size = 0x800, scoped, tag = 'scratch operand']
  %s0 = inlined_call_operand.vmem [shape: f32[2,4,256], index: 0, kind: input, shape index: {}]
  %s1 = inlined_call_operand.vmem [shape: s32[2,8,1], index: 1, kind: input, shape index: {}]
  %s2 = inlined_call_operand.hbm [shape: f32[2,1,8], index: 2, kind: input, shape index: {}]
  %s3 = inlined_call_operand.vmem [shape: f32[2,4,8], index: 3, kind: input, shape index: {}]
  %s4 = inlined_call_operand.hbm [shape: f32[2,1,128], index: 4, kind: output, shape index: {}]
  %s5 = sld [smem:[#allocation0]]
  $region65: #{tpu_custom_call.1} parent=0
    _
  %s7 = ssub.s32 1, %s5
  %s8 = scalar_select 0, %s7, %s5
  $region1: #{tpu_custom_call.1} parent=0
    #allocation3 [shape = 'u8[1024]{0}', space=vmem, size = 0x400, scoped, tag = 'input window, operand 2']
    #allocation4 [shape = 's32[2]{0}', space=sflag, size = 0x8, scoped, tag = 'scoped memory for tpu_custom_call.1']
    #allocation5 [shape = 's32[2]{0}', space=sflag, size = 0x8, scoped, tag = 'scoped memory for tpu_custom_call.1']
    #allocation6 [shape = 'u8[1024]{0}', space=vmem, size = 0x400, scoped, tag = 'output window, operand 0']
    %9 = vsyncpa [#allocation4], 0
    %s10 = scalar_lea.sflag [#allocation4], 1
    %11 = vsyncpa %s10, 0
    %12 = vsyncpa [#allocation5], 0
    %s13 = scalar_lea.sflag [#allocation5], 1
    %14 = vsyncpa %s13, 0
    loop: start=0, step=1, limit=4
    $region2: #{tpu_custom_call.1} parent=1 // loop_pre_header
      _
    $region3: #{tpu_custom_call.1} parent=1 // loop_header
      %s16 = sphi 0, %s20
      %p17 = scmp.ge.s32.totalorder %s16, 4
      %s23 = sphi 0, %s35
      %s24 = sphi 0, %s31
      %s25 = sphi 0, %s23
      %s26 = sphi 0, %s24
      %s27 = sphi 0, %s25
      %s28 = sphi 0, %s26
      %s40 = sphi 0, %s42
      %s43 = sphi 0, %s40
      %s44 = sphi 0, %s43
      %s60 = sphi 0, %s44
      %s66 = sphi 0, %s68
      %s69 = sphi 0, %s66
      %s70 = sphi 0, %s69
      %s86 = sphi 0, %s70
      %s92 = sphi 0, %s94
      %s95 = sphi 0, %s92
      %s96 = sphi 0, %s95
      %s112 = sphi 0, %s96
      %s118 = sphi 0, %s120
      %s121 = sphi 0, %s118
      %s122 = sphi 0, %s121
      %s138 = sphi 0, %s122
      %s144 = sphi 0, %s146
      %s147 = sphi 0, %s144
      %s148 = sphi 0, %s147
      %s164 = sphi 0, %s148
    $region4: #{tpu_custom_call.1} parent=1 // loop_header_branch
      %19 = sbr.rel (%p17) target = $region8
    $region5: #{tpu_custom_call.1} parent=1 // loop_body
      %s21 = ssub.s32 %s16, 1
      %s22 = ssub.s32 %s16, 2
      %s29 = sadd.s32 1, %s24
      %p30 = scmp.ge.s32.totalorder %s29, 1
      %s31 = scalar_select %p30, 0, %s29
      %s32 = sadd.s32 1, %s23
      %s33 = scalar_select %p30, %s32, %s23
      %p34 = scmp.ge.s32.totalorder %s33, 2
      %s35 = scalar_select %p34, 0, %s33
      %s36 = ssub.s32 %s23, %s35
      %s37 = ssub.s32 %s24, %s31
      %s38 = sor.u32 %s36, %s37
      %p39 = scmp.eq.s32.totalorder %s38, 0
      %s41 = sadd.s32 %s40, 1
      %s42 = scalar_select %p39, %s40, %s41
      %p45 = pneg %p39
      %p46 = scmp.eq.s32.totalorder %s16, 1
      %p47 = por %p45, %p46
      %p48 = scmp.ne.s32.totalorder %s40, %s43
      %p49 = scmp.eq.s32.totalorder %s16, 0
      %p50 = por %p48, %p49
      %p51 = scmp.ne.s32.totalorder %s40, %s43
      %p52 = scmp.eq.s32.totalorder %s21, 1
      %p53 = por %p51, %p52
      %p54 = scmp.ne.s32.totalorder %s43, %s44
      %p55 = scmp.eq.s32.totalorder %s21, 0
      %p56 = por %p54, %p55
      %p57 = scmp.ne.s32.totalorder %s43, %s44
      %p58 = scmp.eq.s32.totalorder %s22, 1
      %p59 = por %p57, %p58
      %p61 = scmp.ne.s32.totalorder %s44, %s60
      %p62 = scmp.eq.s32.totalorder %s22, 0
      %p63 = por %p61, %p62
      %s64 = ssub.s32 %s23, %s35
      %p65 = scmp.eq.s32.totalorder %s64, 0
      %s67 = sadd.s32 %s66, 1
      %s68 = scalar_select %p65, %s66, %s67
      %p71 = pneg %p65
      %p72 = scmp.eq.s32.totalorder %s16, 1
      %p73 = por %p71, %p72
      %p74 = scmp.ne.s32.totalorder %s66, %s69
      %p75 = scmp.eq.s32.totalorder %s16, 0
      %p76 = por %p74, %p75
      %p77 = scmp.ne.s32.totalorder %s66, %s69
      %p78 = scmp.eq.s32.totalorder %s21, 1
      %p79 = por %p77, %p78
      %p80 = scmp.ne.s32.totalorder %s69, %s70
      %p81 = scmp.eq.s32.totalorder %s21, 0
      %p82 = por %p80, %p81
      %p83 = scmp.ne.s32.totalorder %s69, %s70
      %p84 = scmp.eq.s32.totalorder %s22, 1
      %p85 = por %p83, %p84
      %p87 = scmp.ne.s32.totalorder %s70, %s86
      %p88 = scmp.eq.s32.totalorder %s22, 0
      %p89 = por %p87, %p88
      %s90 = ssub.s32 %s23, %s35
      %p91 = scmp.eq.s32.totalorder %s90, 0
      %s93 = sadd.s32 %s92, 1
      %s94 = scalar_select %p91, %s92, %s93
      %p97 = pneg %p91
      %p98 = scmp.eq.s32.totalorder %s16, 1
      %p99 = por %p97, %p98
      %p100 = scmp.ne.s32.totalorder %s92, %s95
      %p101 = scmp.eq.s32.totalorder %s16, 0
      %p102 = por %p100, %p101
      %p103 = scmp.ne.s32.totalorder %s92, %s95
      %p104 = scmp.eq.s32.totalorder %s21, 1
      %p105 = por %p103, %p104
      %p106 = scmp.ne.s32.totalorder %s95, %s96
      %p107 = scmp.eq.s32.totalorder %s21, 0
      %p108 = por %p106, %p107
      %p109 = scmp.ne.s32.totalorder %s95, %s96
      %p110 = scmp.eq.s32.totalorder %s22, 1
      %p111 = por %p109, %p110
      %p113 = scmp.ne.s32.totalorder %s96, %s112
      %p114 = scmp.eq.s32.totalorder %s22, 0
      %p115 = por %p113, %p114
      %s116 = ssub.s32 %s23, %s35
      %p117 = scmp.eq.s32.totalorder %s116, 0
      %s119 = sadd.s32 %s118, 1
      %s120 = scalar_select %p117, %s118, %s119
      %p123 = pneg %p117
      %p124 = scmp.eq.s32.totalorder %s16, 1
      %p125 = por %p123, %p124
      %p126 = scmp.ne.s32.totalorder %s118, %s121
      %p127 = scmp.eq.s32.totalorder %s16, 0
      %p128 = por %p126, %p127
      %p129 = scmp.ne.s32.totalorder %s118, %s121
      %p130 = scmp.eq.s32.totalorder %s21, 1
      %p131 = por %p129, %p130
      %p132 = scmp.ne.s32.totalorder %s121, %s122
      %p133 = scmp.eq.s32.totalorder %s21, 0
      %p134 = por %p132, %p133
      %p135 = scmp.ne.s32.totalorder %s121, %s122
      %p136 = scmp.eq.s32.totalorder %s22, 1
      %p137 = por %p135, %p136
      %p139 = scmp.ne.s32.totalorder %s122, %s138
      %p140 = scmp.eq.s32.totalorder %s22, 0
      %p141 = por %p139, %p140
      %s142 = ssub.s32 %s23, %s35
      %p143 = scmp.eq.s32.totalorder %s142, 0
      %s145 = sadd.s32 %s144, 1
      %s146 = scalar_select %p143, %s144, %s145
      %p149 = pneg %p143
      %p150 = scmp.eq.s32.totalorder %s16, 1
      %p151 = por %p149, %p150
      %p152 = scmp.ne.s32.totalorder %s144, %s147
      %p153 = scmp.eq.s32.totalorder %s16, 0
      %p154 = por %p152, %p153
      %p155 = scmp.ne.s32.totalorder %s144, %s147
      %p156 = scmp.eq.s32.totalorder %s21, 1
      %p157 = por %p155, %p156
      %p158 = scmp.ne.s32.totalorder %s147, %s148
      %p159 = scmp.eq.s32.totalorder %s21, 0
      %p160 = por %p158, %p159
      %p161 = scmp.ne.s32.totalorder %s147, %s148
      %p162 = scmp.eq.s32.totalorder %s22, 1
      %p163 = por %p161, %p162
      %p165 = scmp.ne.s32.totalorder %s148, %s164
      %p166 = scmp.eq.s32.totalorder %s22, 0
      %p167 = por %p165, %p166
      %p168 = scmp.le.s32.totalorder 1, %s16
      %p169 = scmp.lt.s32.totalorder %s16, 3
      %p170 = pnand %p168, %p169
      %p171 = pneg %p170
      // Predicated region
      $region9: #{tpu_custom_call.1} parent=5 // pred_check
        _
      $region10: #{tpu_custom_call.1} parent=5 // pred_check_branch
        %173 = sbr.rel (%p170) target = $region12
      $region11: #{tpu_custom_call.1} parent=5 // pred_region
        %s174 = ssub.s32 %s16, 1
      $region12: #{tpu_custom_call.1} parent=5 // pred_fallthru
        _
      %p175 = scmp.lt.s32.totalorder %s16, 2
      // Predicated region
      $region13: #{tpu_custom_call.1} parent=5 // pred_check
        %p176 = pneg %p175
      $region14: #{tpu_custom_call.1} parent=5 // pred_check_branch
        %178 = sbr.rel (%p176) target = $region16
      $region15: #{tpu_custom_call.1} parent=5 // pred_region
        // Predicated region
        $region17: #{tpu_custom_call.1} parent=15 // pred_check
          %p179 = pneg %p50
        $region18: #{tpu_custom_call.1} parent=15 // pred_check_branch
          %181 = sbr.rel (%p179) target = $region20
        $region19: #{tpu_custom_call.1} parent=15 // pred_region
          %s182 = smul.u32 2, %s24
          %p183 = scmp.lt.s32.totalorder %s23, 1
          %s184 = scalar_select %p183, %s23, 1
          %p185 = scmp.lt.s32.totalorder %s182, 1
          %s186 = scalar_select %p185, %s182, 1
          %s187 = smul.addr %s184, 2
          %s188 = sadd.s32 %s186, %s187
          %s189 = smul.addr %s188, 4
          %s190 = scalar_lea.vmem %s0, %s189
          %s191 = smul.u32 2, %s24
        $region20: #{tpu_custom_call.1} parent=15 // pred_fallthru
          _
        // Predicated region
        $region21: #{tpu_custom_call.1} parent=15 // pred_check
          %p192 = pneg %p76
        $region22: #{tpu_custom_call.1} parent=15 // pred_check_branch
          %194 = sbr.rel (%p192) target = $region24
        $region23: #{tpu_custom_call.1} parent=15 // pred_region
          %p195 = scmp.lt.s32.totalorder %s23, 1
          %s196 = scalar_select %p195, %s23, 1
          %s197 = smul.addr %s196, 8
          %s198 = scalar_lea.vmem %s1, %s197
        $region24: #{tpu_custom_call.1} parent=15 // pred_fallthru
          _
        // Predicated region
        $region25: #{tpu_custom_call.1} parent=15 // pred_check
          %p199 = pneg %p102
        $region26: #{tpu_custom_call.1} parent=15 // pred_check_branch
          %201 = sbr.rel (%p199) target = $region28
        $region27: #{tpu_custom_call.1} parent=15 // pred_region
          %s202 = sand.u32 %s92, 1
          %s203 = scalar_lea.sflag [#allocation4], %s202
          %s204 = sand.u32 %s92, 1
          %s205 = scalar_lea.vmem [#allocation3], %s204
          %s207 = ssub.s32 16, 16
          %208 = vsyncadd %s203, %s207
          %s209 = smul.addr %s23, 16
          %s210 = scalar_lea.hbm %s2, %s209
          %s212 = sshll.u32 %s205, 4
          %s213 = int_to_ptr.vmem [resolvable:$true] %s212
          %215 = dma.hbm_to_vmem [thread:$0]  %s210, 16, %s213, %s203
        $region28: #{tpu_custom_call.1} parent=15 // pred_fallthru
          _
        // Predicated region
        $region29: #{tpu_custom_call.1} parent=15 // pred_check
          %p216 = pneg %p128
        $region30: #{tpu_custom_call.1} parent=15 // pred_check_branch
          %218 = sbr.rel (%p216) target = $region32
        $region31: #{tpu_custom_call.1} parent=15 // pred_region
          %p219 = scmp.lt.s32.totalorder %s23, 1
          %s220 = scalar_select %p219, %s23, 1
          %s221 = smul.addr %s220, 4
          %s222 = scalar_lea.vmem %s3, %s221
        $region32: #{tpu_custom_call.1} parent=15 // pred_fallthru
          _
      $region16: #{tpu_custom_call.1} parent=5 // pred_fallthru
        _
      %p223 = scmp.le.s32.totalorder 1, %s16
      %p224 = scmp.lt.s32.totalorder %s16, 3
      %p225 = pnand %p223, %p224
      %p226 = pneg %p225
      // Predicated region
      $region33: #{tpu_custom_call.1} parent=5 // pred_check
        _
      $region34: #{tpu_custom_call.1} parent=5 // pred_check_branch
        %228 = sbr.rel (%p225) target = $region36
      $region35: #{tpu_custom_call.1} parent=5 // pred_region
        %s229 = ssub.s32 %s16, 1
        %s230 = sand.u32 %s95, 1
        %s231 = scalar_lea.sflag [#allocation4], %s230
        %s232 = sand.u32 %s95, 1
        %s233 = scalar_lea.vmem [#allocation3], %s232
        // Predicated region
        $region37: #{tpu_custom_call.1} parent=35 // pred_check
          %p234 = pneg %p108
        $region38: #{tpu_custom_call.1} parent=35 // pred_check_branch
          %236 = sbr.rel (%p234) target = $region40
        $region39: #{tpu_custom_call.1} parent=35 // pred_region
          %237 = dma.done %s231, 16
        $region40: #{tpu_custom_call.1} parent=35 // pred_fallthru
          _
        %s238 = smul.u32 2, %s26
        %p239 = scmp.lt.s32.totalorder %s25, 1
        %s240 = scalar_select %p239, %s25, 1
        %p241 = scmp.lt.s32.totalorder %s238, 1
        %s242 = scalar_select %p241, %s238, 1
        %s243 = smul.addr %s240, 2
        %s244 = sadd.s32 %s242, %s243
        %s245 = smul.addr %s244, 4
        %s246 = scalar_lea.vmem %s0, %s245
        %p247 = pneg %p56
        %p248 = pneg %p53
        %p249 = scmp.lt.s32.totalorder %s25, 1
        %s250 = scalar_select %p249, %s25, 1
        %s251 = smul.addr %s250, 8
        %s252 = scalar_lea.vmem %s1, %s251
        %p253 = pneg %p82
        %p254 = pneg %p79
        %s255 = sand.u32 %s95, 1
        %s256 = scalar_lea.sflag [#allocation4], %s255
        %s257 = sand.u32 %s95, 1
        %s258 = scalar_lea.vmem [#allocation3], %s257
        %p259 = pneg %p108
        %p260 = pneg %p105
        %p261 = scmp.lt.s32.totalorder %s25, 1
        %s262 = scalar_select %p261, %s25, 1
        %s263 = smul.addr %s262, 4
        %s264 = scalar_lea.vmem %s3, %s263
        %p265 = pneg %p134
        %p266 = pneg %p131
        %p267 = pneg %p160
        %p268 = pneg %p157
        %s269 = sand.u32 %s147, 1
        %s270 = scalar_lea.sflag [#allocation5], %s269
        %s271 = sand.u32 %s147, 1
        %s272 = scalar_lea.vmem [#allocation6], %s271
        %s273 = smul.u32 2, %s26
        %p274 = scmp.lt.s32.totalorder %s25, 1
        %s275 = scalar_select %p274, %s25, 1
        %p276 = scmp.lt.s32.totalorder %s273, 1
        %s277 = scalar_select %p276, %s273, 1
        %s278 = smul.addr %s275, 2
        %s279 = sadd.s32 %s277, %s278
        %s280 = smul.addr %s279, 4
        %s281 = scalar_lea.vmem %s0, %s280
        %s282 = smul.u32 2, %s26
        %p283 = scmp.lt.s32.totalorder %s25, 1
        %s284 = scalar_select %p283, %s25, 1
        %s285 = smul.addr %s284, 8
        %s286 = scalar_lea.vmem %s1, %s285
        %p287 = scmp.lt.s32.totalorder %s25, 1
        %s288 = scalar_select %p287, %s25, 1
        %s289 = smul.addr %s288, 4
        %s290 = scalar_lea.vmem %s3, %s289
        %v291 = vld [vmem:[%s286] sm:$0xff]
        %s292 = smul.u32 %s26, 256
        %v293 = vstv %s292
        %v294 = vsub.s32 %v291, %v293
        %v295 = vlaneseq
        %v296 = vand.u32 %v295, 127
        %v297 = vadd.s32 %v296, 128
        %298 = vset.pattern.permute.xlu0 0
        %299 = vperm.xlu0 %298, %v294
        %v300 = vpop.permute.xlu0 %299
        %vm301 = vcmp.eq.s32.totalorder %v296, %v300
        %vm302 = vcmp.eq.s32.totalorder %v297, %v300
        %v303 = vsel %vm301, 1, 0
        %v304 = vsel %vm302, 1, 0
        %v305 = vcvt.s32.f32 %v303
        %v306 = vcvt.s32.f32 %v304
        %v307 = vld [vmem:[%s281] sm:$0xff]
        %v309 = vcombine.high %v307, %v307
        %v311 = vand.u32 %v306, 4294901760
        %312 = vmatprep.subr.mxu0 %v311
        %v313 = vand.u32 %v305, 4294901760
        %314 = vmatpush1.xpose.msra.mxu0 %v313
        %315 = vmatprep.subr.mxu0 0.0
        %316 = vmatpush1.xpose.msra.mxu0 0.0
        %317 = vmatprep.subr.mxu0 0.0
        %318 = vmatpush1.xpose.msra.mxu0 0.0
        %319 = vmatprep.subr.mxu0 0.0
        %320 = vmatpush1.xpose.msra.mxu0 0.0
        %321 = vmatprep.subr.mxu0 0.0
        %322 = vmatpush1.xpose.msra.mxu0 0.0
        %323 = vmatprep.subr.mxu0 0.0
        %324 = vmatpush1.xpose.msra.mxu0 0.0
        %325 = vmatprep.subr.mxu0 0.0
        %326 = vmatpush1.xpose.msra.mxu0 0.0
        %327 = vmatprep.subr.mxu0 0.0
        %328 = vmatpush1.xpose.msra.mxu0 0.0
        %329 = vmatprep.subr.mxu0 0.0
        %330 = vmatpush1.xpose.msra.mxu0 0.0
        %331 = vmatprep.subr.mxu0 0.0
        %332 = vmatpush1.xpose.msra.mxu0 0.0
        %333 = vmatprep.subr.mxu0 0.0
        %334 = vmatpush1.xpose.msra.mxu0 0.0
        %335 = vmatprep.subr.mxu0 0.0
        %336 = vmatpush1.xpose.msra.mxu0 0.0
        %337 = vmatprep.subr.mxu0 0.0
        %338 = vmatpush1.xpose.msra.mxu0 0.0
        %339 = vmatprep.subr.mxu0 0.0
        %340 = vmatpush1.xpose.msra.mxu0 0.0
        %341 = vmatprep.subr.mxu0 0.0
        %342 = vmatpush1.xpose.msra.mxu0 0.0
        %343 = vmatprep.subr.mxu0 0.0
        %344 = vmatpush1.xpose.msra.mxu0 0.0
        %345 = vmatprep.subr.mxu0 0.0
        %346 = vmatpush1.xpose.msra.mxu0 0.0
        %347 = vmatprep.subr.mxu0 0.0
        %348 = vmatpush1.xpose.msra.mxu0 0.0
        %349 = vmatprep.subr.mxu0 0.0
        %350 = vmatpush1.xpose.msra.mxu0 0.0
        %351 = vmatprep.subr.mxu0 0.0
        %352 = vmatpush1.xpose.msra.mxu0 0.0
        %353 = vmatprep.subr.mxu0 0.0
        %354 = vmatpush1.xpose.msra.mxu0 0.0
        %355 = vmatprep.subr.mxu0 0.0
        %356 = vmatpush1.xpose.msra.mxu0 0.0
        %357 = vmatprep.subr.mxu0 0.0
        %358 = vmatpush1.xpose.msra.mxu0 0.0
        %359 = vmatprep.subr.mxu0 0.0
        %360 = vmatpush1.xpose.msra.mxu0 0.0
        %361 = vmatprep.subr.mxu0 0.0
        %362 = vmatpush1.xpose.msra.mxu0 0.0
        %363 = vmatprep.subr.mxu0 0.0
        %364 = vmatpush1.xpose.msra.mxu0 0.0
        %365 = vmatprep.subr.mxu0 0.0
        %366 = vmatpush1.xpose.msra.mxu0 0.0
        %367 = vmatprep.subr.mxu0 0.0
        %368 = vmatpush1.xpose.msra.mxu0 0.0
        %369 = vmatprep.subr.mxu0 0.0
        %370 = vmatpush1.xpose.msra.mxu0 0.0
        %371 = vmatprep.subr.mxu0 0.0
        %372 = vmatpush1.xpose.msra.mxu0 0.0
        %373 = vmatprep.subr.mxu0 0.0
        %374 = vmatpush1.xpose.msra.mxu0 0.0
        %375 = vmatprep.subr.mxu0 0.0
        %376 = vmatpush1.xpose.msra.mxu0 0.0
        %v377 = vand.u32 %v309, 4294901760
        %v378 = vsub.f32 %v309, %v377
        %v379 = vand.u32 %v378, 4294901760
        %v380 = vsub.f32 %v378, %v379
        %v381 = vand.u32 %v380, 4294901760
        %382 = vmatprep.mubr.f32.mxu0 %v381
        %v383 = vand.u32 %v307, 4294901760
        %v384 = vsub.f32 %v307, %v383
        %v385 = vand.u32 %v384, 4294901760
        %v386 = vsub.f32 %v384, %v385
        %v387 = vand.u32 %v386, 4294901760
        %388 = vmatmul.mubr.f32.gmra.mrb[0].mxu0 %v387
        %v389 = vpop.f32.mrb[0].mxu0
        %v390 = vadd.f32 0.0, %v389
        %v391 = vpop.f32.mrb[0].mxu0
        %392 = vdwg.mxu0
        %v393 = vand.u32 %v306, 4294901760
        %v394 = vsub.f32 %v306, %v393
        %v395 = vand.u32 %v394, 4294901760
        %v396 = vsub.f32 %v394, %v395
        %v397 = vand.u32 %v396, 4294901760
        %398 = vmatprep.subr.mxu0 %v397
        %v399 = vand.u32 %v305, 4294901760
        %v400 = vsub.f32 %v305, %v399
        %v401 = vand.u32 %v400, 4294901760
        %v402 = vsub.f32 %v400, %v401
        %v403 = vand.u32 %v402, 4294901760
        %404 = vmatpush1.xpose.msra.mxu0 %v403
        %405 = vmatprep.subr.mxu0 0.0
        %406 = vmatpush1.xpose.msra.mxu0 0.0
        %407 = vmatprep.subr.mxu0 0.0
        %408 = vmatpush1.xpose.msra.mxu0 0.0
        %409 = vmatprep.subr.mxu0 0.0
        %410 = vmatpush1.xpose.msra.mxu0 0.0
        %411 = vmatprep.subr.mxu0 0.0
        %412 = vmatpush1.xpose.msra.mxu0 0.0
        %413 = vmatprep.subr.mxu0 0.0
        %414 = vmatpush1.xpose.msra.mxu0 0.0
        %415 = vmatprep.subr.mxu0 0.0
        %416 = vmatpush1.xpose.msra.mxu0 0.0
        %417 = vmatprep.subr.mxu0 0.0
        %418 = vmatpush1.xpose.msra.mxu0 0.0
        %419 = vmatprep.subr.mxu0 0.0
        %420 = vmatpush1.xpose.msra.mxu0 0.0
        %421 = vmatprep.subr.mxu0 0.0
        %422 = vmatpush1.xpose.msra.mxu0 0.0
        %423 = vmatprep.subr.mxu0 0.0
        %424 = vmatpush1.xpose.msra.mxu0 0.0
        %425 = vmatprep.subr.mxu0 0.0
        %426 = vmatpush1.xpose.msra.mxu0 0.0
        %427 = vmatprep.subr.mxu0 0.0
        %428 = vmatpush1.xpose.msra.mxu0 0.0
        %429 = vmatprep.subr.mxu0 0.0
        %430 = vmatpush1.xpose.msra.mxu0 0.0
        %431 = vmatprep.subr.mxu0 0.0
        %432 = vmatpush1.xpose.msra.mxu0 0.0
        %433 = vmatprep.subr.mxu0 0.0
        %434 = vmatpush1.xpose.msra.mxu0 0.0
        %435 = vmatprep.subr.mxu0 0.0
        %436 = vmatpush1.xpose.msra.mxu0 0.0
        %437 = vmatprep.subr.mxu0 0.0
        %438 = vmatpush1.xpose.msra.mxu0 0.0
        %439 = vmatprep.subr.mxu0 0.0
        %440 = vmatpush1.xpose.msra.mxu0 0.0
        %441 = vmatprep.subr.mxu0 0.0
        %442 = vmatpush1.xpose.msra.mxu0 0.0
        %443 = vmatprep.subr.mxu0 0.0
        %444 = vmatpush1.xpose.msra.mxu0 0.0
        %445 = vmatprep.subr.mxu0 0.0
        %446 = vmatpush1.xpose.msra.mxu0 0.0
        %447 = vmatprep.subr.mxu0 0.0
        %448 = vmatpush1.xpose.msra.mxu0 0.0
        %449 = vmatprep.subr.mxu0 0.0
        %450 = vmatpush1.xpose.msra.mxu0 0.0
        %451 = vmatprep.subr.mxu0 0.0
        %452 = vmatpush1.xpose.msra.mxu0 0.0
        %453 = vmatprep.subr.mxu0 0.0
        %454 = vmatpush1.xpose.msra.mxu0 0.0
        %455 = vmatprep.subr.mxu0 0.0
        %456 = vmatpush1.xpose.msra.mxu0 0.0
        %457 = vmatprep.subr.mxu0 0.0
        %458 = vmatpush1.xpose.msra.mxu0 0.0
        %459 = vmatprep.subr.mxu0 0.0
        %460 = vmatpush1.xpose.msra.mxu0 0.0
        %461 = vmatprep.subr.mxu0 0.0
        %462 = vmatpush1.xpose.msra.mxu0 0.0
        %463 = vmatprep.subr.mxu0 0.0
        %464 = vmatpush1.xpose.msra.mxu0 0.0
        %465 = vmatprep.subr.mxu0 0.0
        %466 = vmatpush1.xpose.msra.mxu0 0.0
        %v467 = vand.u32 %v309, 4294901760
        %468 = vmatprep.mubr.f32.mxu0 %v467
        %v469 = vand.u32 %v307, 4294901760
        %470 = vmatmul.mubr.f32.gmra.mrb[0].mxu0 %v469
        %v471 = vpop.f32.mrb[0].mxu0
        %v472 = vadd.f32 %v390, %v471
        %v473 = vpop.f32.mrb[0].mxu0
        %474 = vdwg.mxu0
        %v475 = vand.u32 %v306, 4294901760
        %v476 = vsub.f32 %v306, %v475
        %477 = vmatprep.subr.mxu0 %v476
        %v478 = vand.u32 %v305, 4294901760
        %v479 = vsub.f32 %v305, %v478
        %480 = vmatpush1.xpose.msra.mxu0 %v479
        %481 = vmatprep.subr.mxu0 0.0
        %482 = vmatpush1.xpose.msra.mxu0 0.0
        %483 = vmatprep.subr.mxu0 0.0
        %484 = vmatpush1.xpose.msra.mxu0 0.0
        %485 = vmatprep.subr.mxu0 0.0
        %486 = vmatpush1.xpose.msra.mxu0 0.0
        %487 = vmatprep.subr.mxu0 0.0
        %488 = vmatpush1.xpose.msra.mxu0 0.0
        %489 = vmatprep.subr.mxu0 0.0
        %490 = vmatpush1.xpose.msra.mxu0 0.0
        %491 = vmatprep.subr.mxu0 0.0
        %492 = vmatpush1.xpose.msra.mxu0 0.0
        %493 = vmatprep.subr.mxu0 0.0
        %494 = vmatpush1.xpose.msra.mxu0 0.0
        %495 = vmatprep.subr.mxu0 0.0
        %496 = vmatpush1.xpose.msra.mxu0 0.0
        %497 = vmatprep.subr.mxu0 0.0
        %498 = vmatpush1.xpose.msra.mxu0 0.0
        %499 = vmatprep.subr.mxu0 0.0
        %500 = vmatpush1.xpose.msra.mxu0 0.0
        %501 = vmatprep.subr.mxu0 0.0
        %502 = vmatpush1.xpose.msra.mxu0 0.0
        %503 = vmatprep.subr.mxu0 0.0
        %504 = vmatpush1.xpose.msra.mxu0 0.0
        %505 = vmatprep.subr.mxu0 0.0
        %506 = vmatpush1.xpose.msra.mxu0 0.0
        %507 = vmatprep.subr.mxu0 0.0
        %508 = vmatpush1.xpose.msra.mxu0 0.0
        %509 = vmatprep.subr.mxu0 0.0
        %510 = vmatpush1.xpose.msra.mxu0 0.0
        %511 = vmatprep.subr.mxu0 0.0
        %512 = vmatpush1.xpose.msra.mxu0 0.0
        %513 = vmatprep.subr.mxu0 0.0
        %514 = vmatpush1.xpose.msra.mxu0 0.0
        %515 = vmatprep.subr.mxu0 0.0
        %516 = vmatpush1.xpose.msra.mxu0 0.0
        %517 = vmatprep.subr.mxu0 0.0
        %518 = vmatpush1.xpose.msra.mxu0 0.0
        %519 = vmatprep.subr.mxu0 0.0
        %520 = vmatpush1.xpose.msra.mxu0 0.0
        %521 = vmatprep.subr.mxu0 0.0
        %522 = vmatpush1.xpose.msra.mxu0 0.0
        %523 = vmatprep.subr.mxu0 0.0
        %524 = vmatpush1.xpose.msra.mxu0 0.0
        %525 = vmatprep.subr.mxu0 0.0
        %526 = vmatpush1.xpose.msra.mxu0 0.0
        %527 = vmatprep.subr.mxu0 0.0
        %528 = vmatpush1.xpose.msra.mxu0 0.0
        %529 = vmatprep.subr.mxu0 0.0
        %530 = vmatpush1.xpose.msra.mxu0 0.0
        %531 = vmatprep.subr.mxu0 0.0
        %532 = vmatpush1.xpose.msra.mxu0 0.0
        %533 = vmatprep.subr.mxu0 0.0
        %534 = vmatpush1.xpose.msra.mxu0 0.0
        %535 = vmatprep.subr.mxu0 0.0
        %536 = vmatpush1.xpose.msra.mxu0 0.0
        %537 = vmatprep.subr.mxu0 0.0
        %538 = vmatpush1.xpose.msra.mxu0 0.0
        %539 = vmatprep.subr.mxu0 0.0
        %540 = vmatpush1.xpose.msra.mxu0 0.0
        %541 = vmatprep.subr.mxu0 0.0
        %542 = vmatpush1.xpose.msra.mxu0 0.0
        %v543 = vand.u32 %v309, 4294901760
        %v544 = vsub.f32 %v309, %v543
        %545 = vmatprep.mubr.f32.mxu0 %v544
        %v546 = vand.u32 %v307, 4294901760
        %v547 = vsub.f32 %v307, %v546
        %548 = vmatmul.mubr.f32.gmra.mrb[0].mxu0 %v547
        %v549 = vpop.f32.mrb[0].mxu0
        %v550 = vadd.f32 %v472, %v549
        %v551 = vpop.f32.mrb[0].mxu0
        %552 = vdwg.mxu0
        %v553 = vand.u32 %v306, 4294901760
        %554 = vmatprep.subr.mxu0 %v553
        %v555 = vand.u32 %v305, 4294901760
        %556 = vmatpush1.xpose.msra.mxu0 %v555
        %557 = vmatprep.subr.mxu0 0.0
        %558 = vmatpush1.xpose.msra.mxu0 0.0
        %559 = vmatprep.subr.mxu0 0.0
        %560 = vmatpush1.xpose.msra.mxu0 0.0
        %561 = vmatprep.subr.mxu0 0.0
        %562 = vmatpush1.xpose.msra.mxu0 0.0
        %563 = vmatprep.subr.mxu0 0.0
        %564 = vmatpush1.xpose.msra.mxu0 0.0
        %565 = vmatprep.subr.mxu0 0.0
        %566 = vmatpush1.xpose.msra.mxu0 0.0
        %567 = vmatprep.subr.mxu0 0.0
        %568 = vmatpush1.xpose.msra.mxu0 0.0
        %569 = vmatprep.subr.mxu0 0.0
        %570 = vmatpush1.xpose.msra.mxu0 0.0
        %571 = vmatprep.subr.mxu0 0.0
        %572 = vmatpush1.xpose.msra.mxu0 0.0
        %573 = vmatprep.subr.mxu0 0.0
        %574 = vmatpush1.xpose.msra.mxu0 0.0
        %575 = vmatprep.subr.mxu0 0.0
        %576 = vmatpush1.xpose.msra.mxu0 0.0
        %577 = vmatprep.subr.mxu0 0.0
        %578 = vmatpush1.xpose.msra.mxu0 0.0
        %579 = vmatprep.subr.mxu0 0.0
        %580 = vmatpush1.xpose.msra.mxu0 0.0
        %581 = vmatprep.subr.mxu0 0.0
        %582 = vmatpush1.xpose.msra.mxu0 0.0
        %583 = vmatprep.subr.mxu0 0.0
        %584 = vmatpush1.xpose.msra.mxu0 0.0
        %585 = vmatprep.subr.mxu0 0.0
        %586 = vmatpush1.xpose.msra.mxu0 0.0
        %587 = vmatprep.subr.mxu0 0.0
        %588 = vmatpush1.xpose.msra.mxu0 0.0
        %589 = vmatprep.subr.mxu0 0.0
        %590 = vmatpush1.xpose.msra.mxu0 0.0
        %591 = vmatprep.subr.mxu0 0.0
        %592 = vmatpush1.xpose.msra.mxu0 0.0
        %593 = vmatprep.subr.mxu0 0.0
        %594 = vmatpush1.xpose.msra.mxu0 0.0
        %595 = vmatprep.subr.mxu0 0.0
        %596 = vmatpush1.xpose.msra.mxu0 0.0
        %597 = vmatprep.subr.mxu0 0.0
        %598 = vmatpush1.xpose.msra.mxu0 0.0
        %599 = vmatprep.subr.mxu0 0.0
        %600 = vmatpush1.xpose.msra.mxu0 0.0
        %601 = vmatprep.subr.mxu0 0.0
        %602 = vmatpush1.xpose.msra.mxu0 0.0
        %603 = vmatprep.subr.mxu0 0.0
        %604 = vmatpush1.xpose.msra.mxu0 0.0
        %605 = vmatprep.subr.mxu0 0.0
        %606 = vmatpush1.xpose.msra.mxu0 0.0
        %607 = vmatprep.subr.mxu0 0.0
        %608 = vmatpush1.xpose.msra.mxu0 0.0
        %609 = vmatprep.subr.mxu0 0.0
        %610 = vmatpush1.xpose.msra.mxu0 0.0
        %611 = vmatprep.subr.mxu0 0.0
        %612 = vmatpush1.xpose.msra.mxu0 0.0
        %613 = vmatprep.subr.mxu0 0.0
        %614 = vmatpush1.xpose.msra.mxu0 0.0
        %615 = vmatprep.subr.mxu0 0.0
        %616 = vmatpush1.xpose.msra.mxu0 0.0
        %617 = vmatprep.subr.mxu0 0.0
        %618 = vmatpush1.xpose.msra.mxu0 0.0
        %v619 = vand.u32 %v309, 4294901760
        %v620 = vsub.f32 %v309, %v619
        %v621 = vand.u32 %v620, 4294901760
        %622 = vmatprep.mubr.f32.mxu0 %v621
        %v623 = vand.u32 %v307, 4294901760
        %v624 = vsub.f32 %v307, %v623
        %v625 = vand.u32 %v624, 4294901760
        %626 = vmatmul.mubr.f32.gmra.mrb[0].mxu0 %v625
        %v627 = vpop.f32.mrb[0].mxu0
        %v628 = vadd.f32 %v550, %v627
        %v629 = vpop.f32.mrb[0].mxu0
        %630 = vdwg.mxu0
        %v631 = vand.u32 %v306, 4294901760
        %v632 = vsub.f32 %v306, %v631
        %v633 = vand.u32 %v632, 4294901760
        %634 = vmatprep.subr.mxu0 %v633
        %v635 = vand.u32 %v305, 4294901760
        %v636 = vsub.f32 %v305, %v635
        %v637 = vand.u32 %v636, 4294901760
        %638 = vmatpush1.xpose.msra.mxu0 %v637
        %639 = vmatprep.subr.mxu0 0.0
        %640 = vmatpush1.xpose.msra.mxu0 0.0
        %641 = vmatprep.subr.mxu0 0.0
        %642 = vmatpush1.xpose.msra.mxu0 0.0
        %643 = vmatprep.subr.mxu0 0.0
        %644 = vmatpush1.xpose.msra.mxu0 0.0
        %645 = vmatprep.subr.mxu0 0.0
        %646 = vmatpush1.xpose.msra.mxu0 0.0
        %647 = vmatprep.subr.mxu0 0.0
        %648 = vmatpush1.xpose.msra.mxu0 0.0
        %649 = vmatprep.subr.mxu0 0.0
        %650 = vmatpush1.xpose.msra.mxu0 0.0
        %651 = vmatprep.subr.mxu0 0.0
        %652 = vmatpush1.xpose.msra.mxu0 0.0
        %653 = vmatprep.subr.mxu0 0.0
        %654 = vmatpush1.xpose.msra.mxu0 0.0
        %655 = vmatprep.subr.mxu0 0.0
        %656 = vmatpush1.xpose.msra.mxu0 0.0
        %657 = vmatprep.subr.mxu0 0.0
        %658 = vmatpush1.xpose.msra.mxu0 0.0
        %659 = vmatprep.subr.mxu0 0.0
        %660 = vmatpush1.xpose.msra.mxu0 0.0
        %661 = vmatprep.subr.mxu0 0.0
        %662 = vmatpush1.xpose.msra.mxu0 0.0
        %663 = vmatprep.subr.mxu0 0.0
        %664 = vmatpush1.xpose.msra.mxu0 0.0
        %665 = vmatprep.subr.mxu0 0.0
        %666 = vmatpush1.xpose.msra.mxu0 0.0
        %667 = vmatprep.subr.mxu0 0.0
        %668 = vmatpush1.xpose.msra.mxu0 0.0
        %669 = vmatprep.subr.mxu0 0.0
        %670 = vmatpush1.xpose.msra.mxu0 0.0
        %671 = vmatprep.subr.mxu0 0.0
        %672 = vmatpush1.xpose.msra.mxu0 0.0
        %673 = vmatprep.subr.mxu0 0.0
        %674 = vmatpush1.xpose.msra.mxu0 0.0
        %675 = vmatprep.subr.mxu0 0.0
        %676 = vmatpush1.xpose.msra.mxu0 0.0
        %677 = vmatprep.subr.mxu0 0.0
        %678 = vmatpush1.xpose.msra.mxu0 0.0
        %679 = vmatprep.subr.mxu0 0.0
        %680 = vmatpush1.xpose.msra.mxu0 0.0
        %681 = vmatprep.subr.mxu0 0.0
        %682 = vmatpush1.xpose.msra.mxu0 0.0
        %683 = vmatprep.subr.mxu0 0.0
        %684 = vmatpush1.xpose.msra.mxu0 0.0
        %685 = vmatprep.subr.mxu0 0.0
        %686 = vmatpush1.xpose.msra.mxu0 0.0
        %687 = vmatprep.subr.mxu0 0.0
        %688 = vmatpush1.xpose.msra.mxu0 0.0
        %689 = vmatprep.subr.mxu0 0.0
        %690 = vmatpush1.xpose.msra.mxu0 0.0
        %691 = vmatprep.subr.mxu0 0.0
        %692 = vmatpush1.xpose.msra.mxu0 0.0
        %693 = vmatprep.subr.mxu0 0.0
        %694 = vmatpush1.xpose.msra.mxu0 0.0
        %695 = vmatprep.subr.mxu0 0.0
        %696 = vmatpush1.xpose.msra.mxu0 0.0
        %697 = vmatprep.subr.mxu0 0.0
        %698 = vmatpush1.xpose.msra.mxu0 0.0
        %699 = vmatprep.subr.mxu0 0.0
        %700 = vmatpush1.xpose.msra.mxu0 0.0
        %v701 = vand.u32 %v309, 4294901760
        %702 = vmatprep.mubr.f32.mxu0 %v701
        %v703 = vand.u32 %v307, 4294901760
        %704 = vmatmul.mubr.f32.gmra.mrb[0].mxu0 %v703
        %v705 = vpop.f32.mrb[0].mxu0
        %v706 = vadd.f32 %v628, %v705
        %v707 = vpop.f32.mrb[0].mxu0
        %708 = vdwg.mxu0
        %v709 = vand.u32 %v306, 4294901760
        %710 = vmatprep.subr.mxu0 %v709
        %v711 = vand.u32 %v305, 4294901760
        %712 = vmatpush1.xpose.msra.mxu0 %v711
        %713 = vmatprep.subr.mxu0 0.0
        %714 = vmatpush1.xpose.msra.mxu0 0.0
        %715 = vmatprep.subr.mxu0 0.0
        %716 = vmatpush1.xpose.msra.mxu0 0.0
        %717 = vmatprep.subr.mxu0 0.0
        %718 = vmatpush1.xpose.msra.mxu0 0.0
        %719 = vmatprep.subr.mxu0 0.0
        %720 = vmatpush1.xpose.msra.mxu0 0.0
        %721 = vmatprep.subr.mxu0 0.0
        %722 = vmatpush1.xpose.msra.mxu0 0.0
        %723 = vmatprep.subr.mxu0 0.0
        %724 = vmatpush1.xpose.msra.mxu0 0.0
        %725 = vmatprep.subr.mxu0 0.0
        %726 = vmatpush1.xpose.msra.mxu0 0.0
        %727 = vmatprep.subr.mxu0 0.0
        %728 = vmatpush1.xpose.msra.mxu0 0.0
        %729 = vmatprep.subr.mxu0 0.0
        %730 = vmatpush1.xpose.msra.mxu0 0.0
        %731 = vmatprep.subr.mxu0 0.0
        %732 = vmatpush1.xpose.msra.mxu0 0.0
        %733 = vmatprep.subr.mxu0 0.0
        %734 = vmatpush1.xpose.msra.mxu0 0.0
        %735 = vmatprep.subr.mxu0 0.0
        %736 = vmatpush1.xpose.msra.mxu0 0.0
        %737 = vmatprep.subr.mxu0 0.0
        %738 = vmatpush1.xpose.msra.mxu0 0.0
        %739 = vmatprep.subr.mxu0 0.0
        %740 = vmatpush1.xpose.msra.mxu0 0.0
        %741 = vmatprep.subr.mxu0 0.0
        %742 = vmatpush1.xpose.msra.mxu0 0.0
        %743 = vmatprep.subr.mxu0 0.0
        %744 = vmatpush1.xpose.msra.mxu0 0.0
        %745 = vmatprep.subr.mxu0 0.0
        %746 = vmatpush1.xpose.msra.mxu0 0.0
        %747 = vmatprep.subr.mxu0 0.0
        %748 = vmatpush1.xpose.msra.mxu0 0.0
        %749 = vmatprep.subr.mxu0 0.0
        %750 = vmatpush1.xpose.msra.mxu0 0.0
        %751 = vmatprep.subr.mxu0 0.0
        %752 = vmatpush1.xpose.msra.mxu0 0.0
        %753 = vmatprep.subr.mxu0 0.0
        %754 = vmatpush1.xpose.msra.mxu0 0.0
        %755 = vmatprep.subr.mxu0 0.0
        %756 = vmatpush1.xpose.msra.mxu0 0.0
        %757 = vmatprep.subr.mxu0 0.0
        %758 = vmatpush1.xpose.msra.mxu0 0.0
        %759 = vmatprep.subr.mxu0 0.0
        %760 = vmatpush1.xpose.msra.mxu0 0.0
        %761 = vmatprep.subr.mxu0 0.0
        %762 = vmatpush1.xpose.msra.mxu0 0.0
        %763 = vmatprep.subr.mxu0 0.0
        %764 = vmatpush1.xpose.msra.mxu0 0.0
        %765 = vmatprep.subr.mxu0 0.0
        %766 = vmatpush1.xpose.msra.mxu0 0.0
        %767 = vmatprep.subr.mxu0 0.0
        %768 = vmatpush1.xpose.msra.mxu0 0.0
        %769 = vmatprep.subr.mxu0 0.0
        %770 = vmatpush1.xpose.msra.mxu0 0.0
        %771 = vmatprep.subr.mxu0 0.0
        %772 = vmatpush1.xpose.msra.mxu0 0.0
        %773 = vmatprep.subr.mxu0 0.0
        %774 = vmatpush1.xpose.msra.mxu0 0.0
        %v775 = vand.u32 %v309, 4294901760
        %776 = vmatprep.mubr.f32.mxu0 %v775
        %v777 = vand.u32 %v307, 4294901760
        %778 = vmatmul.mubr.f32.gmra.mrb[0].mxu0 %v777
        %v779 = vpop.f32.mrb[0].mxu0
        %v780 = vadd.f32 %v706, %v779
        %v781 = vpop.f32.mrb[0].mxu0
        %782 = vdwg.mxu0
        %p783 = scmp.eq.s32.totalorder %s26, 0
        // Predicated region
        $region41: #{tpu_custom_call.1} parent=35 // pred_check
          %p784 = pneg %p783
        $region42: #{tpu_custom_call.1} parent=35 // pred_check_branch
          %786 = sbr.rel (%p784) target = $region44
        $region43: #{tpu_custom_call.1} parent=35 // pred_region
          %vm787 = vcmask 60416
          %788 = vst.msk [vmem:[#allocation2] sm:$0xf] %vm787, %v780
        $region44: #{tpu_custom_call.1} parent=35 // pred_fallthru
          _
        %p789 = scmp.ne.s32.totalorder %s26, 0
        // Predicated region
        $region45: #{tpu_custom_call.1} parent=35 // pred_check
          %p790 = pneg %p789
        $region46: #{tpu_custom_call.1} parent=35 // pred_check_branch
          %792 = sbr.rel (%p790) target = $region48
        $region47: #{tpu_custom_call.1} parent=35 // pred_region
          %v793 = vld [vmem:[#allocation2] sm:$0xf]
          %v794 = vadd.f32 %v793, %v780
          %vm795 = vcmask 60416
          %796 = vst.msk [vmem:[#allocation2] sm:$0xf] %vm795, %v794
        $region48: #{tpu_custom_call.1} parent=35 // pred_fallthru
          _
        // Predicated region
        $region49: #{tpu_custom_call.1} parent=35 // pred_check
          %p797 = pneg %p783
        $region50: #{tpu_custom_call.1} parent=35 // pred_check_branch
          %799 = sbr.rel (%p797) target = $region52
        $region51: #{tpu_custom_call.1} parent=35 // pred_region
          %v800 = vld [vmem:[%s233] sm:$0x1]
          %v801 = vld [vmem:[%s290] sm:$0xf]
          %v802 = vld [vmem:[#allocation2] sm:$0xf]
          %v804 = vlaneseq
          %v805 = vshrl.u32 %v804, 7
          %v806 = vsub.s32 0, %v805
          %v807 = vrot.slane %v800, %v806
          %v809 = vmul.f32 %v802, %v807
          %v810 = vmul.f32 %v801, %v807
          %v811 = vsub.f32 %v809, %v810
          %v812 = vand.u32 2147483647, %v811
          %vm813 = vcmp.lt.f32.partialorder %v812, 1.0
          %v814 = vmul.f32 %v812, 0.5
          %v815 = vmul.f32 %v814, %v812
          %v816 = vsub.f32 %v812, 0.5
          %v817 = vsel %vm813, %v815, %v816
          %vm818 = vcmask 60416
          %v819 = vsel %vm818, %v817, 0.0
          %820 = vadd.xlane.f32.xlu0 %v819
          %v821 = vpop.xlane.xlu0 %820
          %v822 = vrot.slane %v821, 4
          %v823 = vadd.f32 %v821, %v822
          %v824 = vrot.slane %v823, 2
          %v825 = vadd.f32 %v823, %v824
          %v826 = vrot.slane %v825, 1
          %v827 = vadd.f32 %v825, %v826
          %s828 = vtos %v827
          %vm829 = vcmask 57344
          %v830 = vsel %vm829, %v800, 0.0
          %831 = vadd.xlane.f32.xlu0 %v830
          %v832 = vpop.xlane.xlu0 %831
          %v833 = vrot.slane %v832, 4
          %v834 = vadd.f32 %v832, %v833
          %v835 = vrot.slane %v834, 2
          %v836 = vadd.f32 %v834, %v835
          %v837 = vrot.slane %v836, 1
          %v838 = vadd.f32 %v836, %v837
          %s839 = vtos %v838
          %s840 = smul.f32 %s839, 4.0
          %vm841 = vcmp.eq.s32.totalorder %v296, 0
          %vm842 = vcmp.eq.s32.totalorder %v296, 1
          %v843 = vstv %s840
          %v844 = vsel %vm842, %v843, 0.0
          %v845 = vstv %s828
          %v846 = vsel %vm841, %v845, %v844
          %847 = vst [vmem:[%s272] sm:$0x1] %v846
        $region52: #{tpu_custom_call.1} parent=35 // pred_fallthru
          _
        %s848 = sand.u32 %s147, 1
        %s849 = scalar_lea.sflag [#allocation5], %s848
        %s850 = sand.u32 %s147, 1
        %s851 = scalar_lea.vmem [#allocation6], %s850
        // Predicated region
        $region53: #{tpu_custom_call.1} parent=35 // pred_check
          %p852 = pneg %p157
        $region54: #{tpu_custom_call.1} parent=35 // pred_check_branch
          %854 = sbr.rel (%p852) target = $region56
        $region55: #{tpu_custom_call.1} parent=35 // pred_region
          %s856 = ssub.s32 16, 16
          %857 = vsyncadd %s849, %s856
          %s858 = smul.addr %s25, 16
          %s859 = scalar_lea.hbm %s4, %s858
          %s861 = sshll.u32 %s851, 4
          %s862 = int_to_ptr.vmem [resolvable:$true] %s861
          %864 = dma.vmem_to_hbm [thread:$0]  %s862, 16, %s859, %s849
        $region56: #{tpu_custom_call.1} parent=35 // pred_fallthru
          _
      $region36: #{tpu_custom_call.1} parent=5 // pred_fallthru
        _
      %p865 = scmp.le.s32.totalorder 2, %s16
      // Predicated region
      $region57: #{tpu_custom_call.1} parent=5 // pred_check
        %p866 = pneg %p865
      $region58: #{tpu_custom_call.1} parent=5 // pred_check_branch
        %868 = sbr.rel (%p866) target = $region60
      $region59: #{tpu_custom_call.1} parent=5 // pred_region
        %s869 = ssub.s32 %s16, 2
        // Predicated region
        $region61: #{tpu_custom_call.1} parent=59 // pred_check
          %p870 = pneg %p163
        $region62: #{tpu_custom_call.1} parent=59 // pred_check_branch
          %872 = sbr.rel (%p870) target = $region64
        $region63: #{tpu_custom_call.1} parent=59 // pred_region
          %s873 = sand.u32 %s148, 1
          %s874 = scalar_lea.sflag [#allocation5], %s873
          %s875 = sand.u32 %s148, 1
          %s876 = scalar_lea.vmem [#allocation6], %s875
          %877 = dma.done %s874, 16
        $region64: #{tpu_custom_call.1} parent=59 // pred_fallthru
          _
      $region60: #{tpu_custom_call.1} parent=5 // pred_fallthru
        _
    $region6: #{tpu_custom_call.1} parent=1 // loop_footer
      %s20 = sadd.s32 1, %s16
    $region7: #{tpu_custom_call.1} parent=1 // loop_footer_branch
      %15 = sbr.rel target = $region3
    $region8: #{tpu_custom_call.1} parent=1 // loop_exit
      _
    %878 = vsyncpa [#allocation4], 1
    %s879 = scalar_lea.sflag [#allocation4], 1
    %880 = vsyncpa %s879, 1
    %881 = vsyncpa [#allocation5], 1
    %s882 = scalar_lea.sflag [#allocation5], 1
    %883 = vsyncpa %s882, 1

</llo_original>
